<compile_context>
chip_gen: v7x
topology: tpu7x:2x2x1
jax: 0.10.0
libtpu: 0.0.40
codegen_flags: <defaults>
</compile_context>

<pallas_src>
import functools

import jax
import jax.numpy as jnp
from jax import lax
from jax.experimental import pallas as pl
from jax.experimental.pallas import tpu as pltpu

GAMMA = 2.0   # module default; the kernel hard-codes the square (gamma == 2)
LANE = 128
SUBLANE = 8
_CHUNK_CANDIDATES = (512, 256, 128, 64, 32, 16, 8)


def _cdiv(a, b):
    return -(-a // b)


def _round_up(a, b):
    return _cdiv(a, b) * b


def _kernel_terms(x, t):
    """Per-element focal*BCE contribution and validity count, in f32."""
    x = x.astype(jnp.float32)
    t = t.astype(jnp.float32)
    mask = t * t                     # target ** 2
    tar = (t + mask) * 0.5           # (target + mask) / 2
    valid = mask > 0.0
    # One exp per element (EUP); sigmoid reuses e = exp(-|x|):
    #   x >= 0: sig = 1/(1+e)        (e = exp(-x))
    #   x <  0: sig = e/(1+e)        (e = exp(+x))
    e = jnp.exp(-jnp.abs(x))
    d = 1.0 + e
    bce = jnp.maximum(x, 0.0) - x * tar + jnp.log1p(e)
    r = pl.reciprocal(d, approx=True)     # EUP slot instead of VALU divide
    r = r * (2.0 - d * r)                 # one Newton step -> ~f32-exact
    sig = jnp.where(x >= 0.0, r, e * r)
    diff = tar - sig
    contrib = jnp.where(valid, diff * diff * bce, 0.0)   # gamma == 2 -> square
    counts = jnp.where(valid, 1.0, 0.0)
    return contrib, counts


def _bce_masked_kernel(x_ref, t_ref, sum_ref, cnt_ref, acc_s, acc_c, *,
                       total_rows, chunk_r, needs_row_mask):
    c = pl.program_id(0)           # per-TensorCore ("parallel") axis
    i = pl.program_id(1)           # sequential reduction axis
    steps = pl.num_programs(1)
    tile_r = x_ref.shape[0]
    n_chunks = tile_r // chunk_r

    @pl.when(i == 0)
    def _():
        acc_s[...] = jnp.zeros_like(acc_s)
        acc_c[...] = jnp.zeros_like(acc_c)

    def load_chunk(j):
        off = pl.multiple_of(j * chunk_r, SUBLANE)
        return x_ref[pl.ds(off, chunk_r), :], t_ref[pl.ds(off, chunk_r), :]

    def accumulate(contrib, counts):
        # Fold rows into the (8, 128) slabs with pure VPU adds; defer the
        # cross-lane/sublane reduce to the wrapper on the tiny output.
        acc_s[...] += jnp.sum(contrib.reshape(-1, SUBLANE, LANE), axis=0)
        acc_c[...] += jnp.sum(counts.reshape(-1, SUBLANE, LANE), axis=0)

    def chunk_body_fast(j, carry):
        xc, tc = load_chunk(j)
        contrib, counts = _kernel_terms(xc, tc)
        accumulate(contrib, counts)
        return carry

    if needs_row_mask:
        # This (c, i) step nominally covers global rows
        # [tile_idx*tile_r, (tile_idx+1)*tile_r); tile_rem is how many of
        # those rows are real.  The masked path only runs for the final
        # (partial) tile and for redundant clamped tiles (tile_rem <= 0);
        # every full tile takes the unmasked fast path.
        tile_idx = c * steps + i
        tile_rem = total_rows - tile_idx * tile_r

        @pl.when(tile_rem >= tile_r)
        def _():
            lax.fori_loop(0, n_chunks, chunk_body_fast, 0, unroll=False)

        @pl.when(tile_rem < tile_r)
        def _():
            def chunk_body_masked(j, carry):
                xc, tc = load_chunk(j)
                contrib, counts = _kernel_terms(xc, tc)
                rem = tile_rem - j * chunk_r            # rows valid in chunk
                row_ids = lax.broadcasted_iota(jnp.int32, contrib.shape, 0)
                in_b = row_ids < rem
                accumulate(jnp.where(in_b, contrib, 0.0),
                           jnp.where(in_b, counts, 0.0))
                return carry

            lax.fori_loop(0, n_chunks, chunk_body_masked, 0, unroll=False)
    else:
        lax.fori_loop(0, n_chunks, chunk_body_fast, 0, unroll=False)

    @pl.when(i == steps - 1)
    def _():
        sum_ref[...] = acc_s[...].reshape(1, SUBLANE, LANE)
        cnt_ref[...] = acc_c[...].reshape(1, SUBLANE, LANE)


def _tensorcores_per_device():
    """2 only on generations exposing two TensorCores per device (v4/v5p/v7x)."""
    try:
        kind = jax.devices()[0].device_kind.lower()
    except Exception:
        return 1
    if ("v7" in kind) or ("v5p" in kind) or ("v4" in kind):
        return 2
    return 1


def _physical_vmem_bytes():
    try:
        info = pltpu.get_tpu_info()
        v = getattr(info, "vmem_capacity_bytes", None)
        if v:
            return int(v)
    except Exception:
        pass
    return 64 * 1024 * 1024      # conservative default: v7x per-TC budget


def _pick_chunk_rows(tile_r):
    for c in _CHUNK_CANDIDATES:
        if tile_r % c == 0:
            return c
    return tile_r


def _xla_masked_terms(x, t):
    """Pure-XLA masked sum / count for the tiny (<128 element) tail."""
    x = x.astype(jnp.float32)
    t = t.astype(jnp.float32)
    mask = t * t
    valid = mask > 0.0
    tar = (t + mask) * 0.5
    e = jnp.exp(-jnp.abs(x))
    bce = jnp.maximum(x, 0.0) - x * tar + jnp.log1p(e)
    r = 1.0 / (1.0 + e)
    sig = jnp.where(x >= 0.0, r, e * r)
    diff = tar - sig
    contrib = jnp.where(valid, diff * diff * bce, 0.0)
    return jnp.sum(contrib), jnp.sum(valid.astype(jnp.float32))


@functools.partial(jax.jit, static_argnames=("tile_rows",))
def bce_masked_loss(inputs, targets, *, tile_rows=8192):
    if inputs.shape != targets.shape:
        raise ValueError(
            "Target size ({}) must be the same as input size ({})".format(
                targets.shape, inputs.shape
            )
        )
    if tile_rows < SUBLANE or tile_rows % SUBLANE != 0:
        raise ValueError("tile_rows must be a positive multiple of 8")

    # Keep native dtypes: the kernel upcasts in-register (bf16 inputs halve
    # HBM traffic).  reshape(-1) of a contiguous array is free.
    x = inputs.reshape(-1)
    t = targets.reshape(-1)
    n = x.shape[0]

    # No jnp.pad (that was a full HBM->HBM copy of both inputs).  The kernel
    # consumes the largest 128-aligned prefix (zero-copy when n % 128 == 0)
    # and the sub-128-element tail is reduced in plain XLA below.
    n_main = (n // LANE) * LANE
    rows = n_main // LANE

    total_sum = jnp.zeros((), jnp.float32)
    total_cnt = jnp.zeros((), jnp.float32)

    if rows > 0:
        if n_main == n:
            x2 = x.reshape(rows, LANE)          # free reshape, no copy
            t2 = t.reshape(rows, LANE)
        else:
            # TODO(synk): prefix isn't 128-aligned -> this slice materializes
            # a copy of the prefix (rare for ML tensor shapes).
            x2 = lax.slice(x, (0,), (n_main,)).reshape(rows, LANE)
            t2 = lax.slice(t, (0,), (n_main,)).reshape(rows, LANE)

        # --- device-aware tile / VMEM selection ------------------------------
        in_itemsize = x2.dtype.itemsize + t2.dtype.itemsize
        tile_rows_eff = tile_rows * 2 if in_itemsize <= 4 else tile_rows

        phys_vmem = _physical_vmem_bytes()
        budget = (phys_vmem * 3) // 4            # leave headroom for Mosaic
        per_row_bytes = in_itemsize * LANE
        headroom = 12 * 1024 * 1024              # chunk intermediates, outputs

        tile_r = min(tile_rows_eff, _round_up(rows, SUBLANE))
        while tile_r > SUBLANE and (2 * tile_r * per_row_bytes + headroom) > budget:
            tile_r = max(SUBLANE, _round_up(tile_r // 2, SUBLANE))
        chunk_r = _pick_chunk_rows(tile_r)

        num_tiles = _cdiv(rows, tile_r)
        cores = _tensorcores_per_device()
        split = 2 if (cores >= 2 and num_tiles >= 2) else 1
        steps = _cdiv(num_tiles, split)
        clamp_needed = num_tiles != split * steps
        needs_row_mask = (rows % tile_r != 0) or clamp_needed

        if clamp_needed:
            def in_map(c, i):
                # Redundant trailing step re-reads the last real tile; its
                # contribution is masked off inside the kernel.
                return (jnp.minimum(c * steps + i, num_tiles - 1), 0)
        else:
            def in_map(c, i):
                return (c * steps + i, 0)

        def out_map(c, i):
            return (c, 0, 0)

        n_elems = rows * LANE
        cost = pl.CostEstimate(
            flops=20 * n_elems,
            transcendentals=3 * n_elems,
            bytes_accessed=(
                n_elems * in_itemsize + 2 * split * SUBLANE * LANE * 4
            ),
        )

        kernel = functools.partial(
            _bce_masked_kernel,
            total_rows=rows,
            chunk_r=chunk_r,
            needs_row_mask=needs_row_mask,
        )

        sums, cnts = pl.pallas_call(
            kernel,
            out_shape=(
                jax.ShapeDtypeStruct((split, SUBLANE, LANE), jnp.float32),
                jax.ShapeDtypeStruct((split, SUBLANE, LANE), jnp.float32),
            ),
            grid_spec=pltpu.PrefetchScalarGridSpec(
                num_scalar_prefetch=0,
                grid=(split, steps),
                in_specs=[
                    pl.BlockSpec((tile_r, LANE), in_map),
                    pl.BlockSpec((tile_r, LANE), in_map),
                ],
                out_specs=[
                    pl.BlockSpec((1, SUBLANE, LANE), out_map),
                    pl.BlockSpec((1, SUBLANE, LANE), out_map),
                ],
                scratch_shapes=[
                    pltpu.VMEM((SUBLANE, LANE), jnp.float32),
                    pltpu.VMEM((SUBLANE, LANE), jnp.float32),
                ],
            ),
            compiler_params=pltpu.CompilerParams(
                dimension_semantics=("parallel", "arbitrary"),
                vmem_limit_bytes=int(budget),
            ),
            cost_estimate=cost,
        )(x2, t2)

        total_sum = total_sum + jnp.sum(sums)
        total_cnt = total_cnt + jnp.sum(cnts)

    if n_main < n:
        tail_s, tail_c = _xla_masked_terms(
            lax.slice(x, (n_main,), (n,)), lax.slice(t, (n_main,), (n,))
        )
        total_sum = total_sum + tail_s
        total_cnt = total_cnt + tail_c

    # Masked mean (NaN if no valid element, matching torch mean of an empty
    # selection).
    return (total_sum / total_cnt).astype(jnp.float32)


def _reference_loss(inputs, targets):
    x = inputs.reshape(-1).astype(jnp.float32)
    t = targets.reshape(-1).astype(jnp.float32)
    mask = t * t
    valid = mask > 0.0
    tar = (t + mask) * 0.5
    bce = jnp.maximum(x, 0.0) - x * tar + jnp.log1p(jnp.exp(-jnp.abs(x)))
    sig = 1.0 / (1.0 + jnp.exp(-x))
    focal = (tar - sig) ** 2
    contrib = jnp.where(valid, focal * bce, 0.0)
    return jnp.sum(contrib) / jnp.sum(valid.astype(jnp.float32))


if __name__ == "__main__":
    key = jax.random.PRNGKey(0)
    k1, k2 = jax.random.split(key)

    # Small NCHW-shaped logits and a target taking values in {-1, 0, +1}
    # (the masked-label convention this loss is built for).
    B, C, H, W = 2, 4, 16, 16
    x = jax.random.normal(k1, (B, C, H, W), dtype=jnp.float32)
    t = jax.random.randint(k2, (B, C, H, W), minval=-1, maxval=2).astype(
        jnp.float32
    )

    loss = bce_masked_loss(x, t)
    loss = jax.block_until_ready(loss)

    ref = jax.block_until_ready(_reference_loss(x, t))
    assert jnp.allclose(loss, ref, rtol=1e-5, atol=1e-6), (loss, ref)

    print("KERNEL_OK")
</pallas_src>

<mosaic_0001>
module attributes {stable_mosaic.version = 11 : i64} {
  func.func @_bce_masked_kernel(%arg0: i32, %arg1: i32, %arg2: memref<16x128xf32, #tpu.memory_space<vmem>>, %arg3: memref<16x128xf32, #tpu.memory_space<vmem>>, %arg4: memref<1x8x128xf32, #tpu.memory_space<vmem>>, %arg5: memref<1x8x128xf32, #tpu.memory_space<vmem>>, %arg6: memref<8x128xf32, #tpu.memory_space<vmem>>, %arg7: memref<8x128xf32, #tpu.memory_space<vmem>>) attributes {dimension_semantics = [#tpu.dimension_semantics<parallel>, #tpu.dimension_semantics<arbitrary>], iteration_bounds = array<i64: 1, 1>, scalar_prefetch = 0 : i64, scratch_operands = 2 : i64, tpu.core_type = #tpu.core_type<tc>, window_params = [{transform_indices = @transform_0, window_bounds = array<i64: 16, 128>}, {transform_indices = @transform_1, window_bounds = array<i64: 16, 128>}, {transform_indices = @transform_2, window_bounds = array<i64: 1, 8, 128>}, {transform_indices = @transform_3, window_bounds = array<i64: 1, 8, 128>}]} {
    %c0_i32 = arith.constant 0 : i32
    %0 = arith.cmpi eq, %arg1, %c0_i32 : i32
    %1 = arith.extui %0 : i1 to i32
    %c0_i32_0 = arith.constant 0 : i32
    %2 = arith.cmpi ne, %1, %c0_i32_0 : i32
    scf.if %2 {
      %cst_24 = arith.constant 0.000000e+00 : f32
      %57 = vector.broadcast %cst_24 : f32 to vector<8x128xf32>
      %c0_25 = arith.constant 0 : index
      %c0_26 = arith.constant 0 : index
      %58 = vector.load %arg6[%c0_25, %c0_26] : memref<8x128xf32, #tpu.memory_space<vmem>>, vector<8x128xf32>
      tpu.vector_store %arg6[%c0_25, %c0_26], %57 {strides = array<i32>} : memref<8x128xf32, #tpu.memory_space<vmem>>, vector<8x128xf32>,
      %cst_27 = arith.constant 0.000000e+00 : f32
      %59 = vector.broadcast %cst_27 : f32 to vector<8x128xf32>
      %c0_28 = arith.constant 0 : index
      %c0_29 = arith.constant 0 : index
      %60 = vector.load %arg7[%c0_28, %c0_29] : memref<8x128xf32, #tpu.memory_space<vmem>>, vector<8x128xf32>
      tpu.vector_store %arg7[%c0_28, %c0_29], %59 {strides = array<i32>} : memref<8x128xf32, #tpu.memory_space<vmem>>, vector<8x128xf32>,
    } else {
    }
    %c0_i32_1 = arith.constant 0 : i32
    %c16_i32 = arith.constant 16 : i32
    %3 = arith.muli %c0_i32_1, %c16_i32 : i32
    %4 = tpu.assume_multiple %3, 8 : i32
    %5 = arith.index_cast %4 : i32 to index
    %c0 = arith.constant 0 : index
    %6 = vector.load %arg2[%5, %c0] : memref<16x128xf32, #tpu.memory_space<vmem>>, vector<16x128xf32>
    %7 = arith.index_cast %4 : i32 to index
    %c0_2 = arith.constant 0 : index
    %8 = vector.load %arg3[%7, %c0_2] : memref<16x128xf32, #tpu.memory_space<vmem>>, vector<16x128xf32>
    %9 = arith.mulf %8, %8 : vector<16x128xf32>
    %10 = arith.addf %8, %9 : vector<16x128xf32>
    %cst = arith.constant 5.000000e-01 : f32
    %11 = vector.broadcast %cst : f32 to vector<16x128xf32>
    %12 = arith.mulf %10, %11 : vector<16x128xf32>
    %cst_3 = arith.constant 0.000000e+00 : f32
    %13 = vector.broadcast %cst_3 : f32 to vector<16x128xf32>
    %14 = arith.cmpf ogt, %9, %13 : vector<16x128xf32>
    %15 = math.absf %6 : vector<16x128xf32>
    %cst_4 = arith.constant 0.000000e+00 : f32
    %16 = vector.broadcast %cst_4 : f32 to vector<16x128xf32>
    %17 = arith.subf %16, %15 : vector<16x128xf32>
    %18 = math.exp %17 : vector<16x128xf32>
    %cst_5 = arith.constant 1.000000e+00 : f32
    %19 = vector.broadcast %cst_5 : f32 to vector<16x128xf32>
    %20 = arith.addf %19, %18 : vector<16x128xf32>
    %cst_6 = arith.constant 0.000000e+00 : f32
    %21 = vector.broadcast %cst_6 : f32 to vector<16x128xf32>
    %22 = arith.maximumf %6, %21 : vector<16x128xf32>
    %23 = arith.mulf %6, %12 : vector<16x128xf32>
    %24 = arith.subf %22, %23 : vector<16x128xf32>
    %25 = math.log1p %18 : vector<16x128xf32>
    %26 = arith.addf %24, %25 : vector<16x128xf32>
    %27 = tpu.reciprocal %20 {approx = true} : vector<16x128xf32> -> vector<16x128xf32>
    %28 = arith.mulf %20, %27 : vector<16x128xf32>
    %cst_7 = arith.constant 2.000000e+00 : f32
    %29 = vector.broadcast %cst_7 : f32 to vector<16x128xf32>
    %30 = arith.subf %29, %28 : vector<16x128xf32>
    %31 = arith.mulf %27, %30 : vector<16x128xf32>
    %cst_8 = arith.constant 0.000000e+00 : f32
    %32 = vector.broadcast %cst_8 : f32 to vector<16x128xf32>
    %33 = arith.cmpf oge, %6, %32 : vector<16x128xf32>
    %34 = arith.mulf %18, %31 : vector<16x128xf32>
    %35 = arith.select %33, %31, %34 : vector<16x128xi1>, vector<16x128xf32>
    %36 = arith.subf %12, %35 : vector<16x128xf32>
    %37 = arith.mulf %36, %36 : vector<16x128xf32>
    %38 = arith.mulf %37, %26 : vector<16x128xf32>
    %cst_9 = arith.constant 0.000000e+00 : f32
    %39 = vector.broadcast %cst_9 : f32 to vector<16x128xf32>
    %40 = arith.select %14, %38, %39 : vector<16x128xi1>, vector<16x128xf32>
    %cst_10 = arith.constant 1.000000e+00 : f32
    %cst_11 = arith.constant 0.000000e+00 : f32
    %41 = vector.broadcast %cst_10 : f32 to vector<16x128xf32>
    %42 = vector.broadcast %cst_11 : f32 to vector<16x128xf32>
    %43 = arith.select %14, %41, %42 : vector<16x128xi1>, vector<16x128xf32>
    %c0_12 = arith.constant 0 : index
    %c0_13 = arith.constant 0 : index
    %44 = vector.load %arg6[%c0_12, %c0_13] : memref<8x128xf32, #tpu.memory_space<vmem>>, vector<8x128xf32>
    %45 = vector.shape_cast %40 : vector<16x128xf32> to vector<2x8x128xf32>
    %cst_14 = arith.constant dense<0.000000e+00> : vector<8x128xf32>
    %46 = vector.multi_reduction <add>, %45, %cst_14 [0] : vector<2x8x128xf32> to vector<8x128xf32>
    %47 = arith.addf %44, %46 : vector<8x128xf32>
    %c0_15 = arith.constant 0 : index
    %c0_16 = arith.constant 0 : index
    %48 = vector.load %arg6[%c0_15, %c0_16] : memref<8x128xf32, #tpu.memory_space<vmem>>, vector<8x128xf32>
    tpu.vector_store %arg6[%c0_15, %c0_16], %47 {strides = array<i32>} : memref<8x128xf32, #tpu.memory_space<vmem>>, vector<8x128xf32>,
    %c0_17 = arith.constant 0 : index
    %c0_18 = arith.constant 0 : index
    %49 = vector.load %arg7[%c0_17, %c0_18] : memref<8x128xf32, #tpu.memory_space<vmem>>, vector<8x128xf32>
    %50 = vector.shape_cast %43 : vector<16x128xf32> to vector<2x8x128xf32>
    %cst_19 = arith.constant dense<0.000000e+00> : vector<8x128xf32>
    %51 = vector.multi_reduction <add>, %50, %cst_19 [0] : vector<2x8x128xf32> to vector<8x128xf32>
    %52 = arith.addf %49, %51 : vector<8x128xf32>
    %c0_20 = arith.constant 0 : index
    %c0_21 = arith.constant 0 : index
    %53 = vector.load %arg7[%c0_20, %c0_21] : memref<8x128xf32, #tpu.memory_space<vmem>>, vector<8x128xf32>
    tpu.vector_store %arg7[%c0_20, %c0_21], %52 {strides = array<i32>} : memref<8x128xf32, #tpu.memory_space<vmem>>, vector<8x128xf32>,
    %c1_i32 = arith.constant 1 : i32
    %c0_i32_22 = arith.constant 0 : i32
    %54 = arith.cmpi eq, %arg1, %c0_i32_22 : i32
    %55 = arith.extui %54 : i1 to i32
    %c0_i32_23 = arith.constant 0 : i32
    %56 = arith.cmpi ne, %55, %c0_i32_23 : i32
    scf.if %56 {
      %c0_24 = arith.constant 0 : index
      %c0_25 = arith.constant 0 : index
      %57 = vector.load %arg6[%c0_24, %c0_25] : memref<8x128xf32, #tpu.memory_space<vmem>>, vector<8x128xf32>
      %58 = vector.shape_cast %57 : vector<8x128xf32> to vector<1x8x128xf32>
      %c0_26 = arith.constant 0 : index
      %c0_27 = arith.constant 0 : index
      %c0_28 = arith.constant 0 : index
      %59 = vector.load %arg4[%c0_26, %c0_27, %c0_28] : memref<1x8x128xf32, #tpu.memory_space<vmem>>, vector<1x8x128xf32>
      tpu.vector_store %arg4[%c0_26, %c0_27, %c0_28], %58 {strides = array<i32>} : memref<1x8x128xf32, #tpu.memory_space<vmem>>, vector<1x8x128xf32>,
      %c0_29 = arith.constant 0 : index
      %c0_30 = arith.constant 0 : index
      %60 = vector.load %arg7[%c0_29, %c0_30] : memref<8x128xf32, #tpu.memory_space<vmem>>, vector<8x128xf32>
      %61 = vector.shape_cast %60 : vector<8x128xf32> to vector<1x8x128xf32>
      %c0_31 = arith.constant 0 : index
      %c0_32 = arith.constant 0 : index
      %c0_33 = arith.constant 0 : index
      %62 = vector.load %arg5[%c0_31, %c0_32, %c0_33] : memref<1x8x128xf32, #tpu.memory_space<vmem>>, vector<1x8x128xf32>
      tpu.vector_store %arg5[%c0_31, %c0_32, %c0_33], %61 {strides = array<i32>} : memref<1x8x128xf32, #tpu.memory_space<vmem>>, vector<1x8x128xf32>,
    } else {
    }
    return
  }
  func.func @transform_0(%arg0: i32, %arg1: i32) -> (i32, i32) {
    %c1_i32 = arith.constant 1 : i32
    %0 = arith.muli %arg0, %c1_i32 : i32
    %1 = arith.addi %0, %arg1 : i32
    %c0_i32 = arith.constant 0 : i32
    %c0_i32_0 = arith.constant 0 : i32
    return %1, %c0_i32 : i32, i32
  }
  func.func @transform_1(%arg0: i32, %arg1: i32) -> (i32, i32) {
    %c1_i32 = arith.constant 1 : i32
    %0 = arith.muli %arg0, %c1_i32 : i32
    %1 = arith.addi %0, %arg1 : i32
    %c0_i32 = arith.constant 0 : i32
    %c0_i32_0 = arith.constant 0 : i32
    return %1, %c0_i32 : i32, i32
  }
  func.func @transform_2(%arg0: i32, %arg1: i32) -> (i32, i32, i32) {
    %c0_i32 = arith.constant 0 : i32
    %c0_i32_0 = arith.constant 0 : i32
    %c0_i32_1 = arith.constant 0 : i32
    return %arg0, %c0_i32, %c0_i32_0 : i32, i32, i32
  }
  func.func @transform_3(%arg0: i32, %arg1: i32) -> (i32, i32, i32) {
    %c0_i32 = arith.constant 0 : i32
    %c0_i32_0 = arith.constant 0 : i32
    %c0_i32_1 = arith.constant 0 : i32
    return %arg0, %c0_i32, %c0_i32_0 : i32, i32, i32
  }
}

</mosaic_0001>

<llo_original>
// kernel: bce_masked_loss.1
$region0: #{bce_masked_loss.1}
  #allocation0 [shape = 'u32[]', space=smem, size = 0x4, offset = 0x4, fixed_abs, tag = 'smem constant byte address 0x4 - core index']
  #allocation1 [shape = 'u32[144,128]{1,0:T(1,128)}', space=vmem, size = 0x12000, scoped, tag = 'internal scratch']
  #allocation2 [shape = 'f32[8,128]{1,0:T(8,128)}', space=vmem, size = 0x1000, scoped, tag = 'scratch operand']
  #allocation3 [shape = 'f32[8,128]{1,0:T(8,128)}', space=vmem, size = 0x1000, scoped, tag = 'scratch operand']
  %s0 = inlined_call_operand.vmem [shape: f32[16,128], index: 0, kind: input, shape index: {}]
  %s1 = inlined_call_operand.vmem [shape: f32[16,128], index: 1, kind: input, shape index: {}]
  %s2 = inlined_call_operand.vmem [shape: f32[1,8,128], index: 2, kind: output, shape index: {0}]
  %s3 = inlined_call_operand.vmem [shape: f32[1,8,128], index: 3, kind: output, shape index: {1}]
  %4 = xla_tuple %s2, %s3
  %s5 = sld [smem:[#allocation0]]
  $region34: #{bce_masked_loss.1} parent=0
    _
  %s7 = ssub.s32 1, %s5
  %s8 = scalar_select 0, %s7, %s5
  // Predicated region
  $region2: #{bce_masked_loss.1} parent=0 // pred_check
    _
  $region3: #{bce_masked_loss.1} parent=0 // pred_check_branch
    %10 = sbr.rel (0) target = $region5
  $region4: #{bce_masked_loss.1} parent=0 // pred_region
    %s11 = sadd.s32 0, 0
    %s12 = smul.u32 2, %s11
    %p13 = scmp.lt.s32.totalorder %s12, 1
    %s14 = scalar_select %p13, %s12, 1
    %s15 = smul.addr %s14, 8
    %s16 = scalar_lea.vmem %s0, %s15
    %s17 = sadd.s32 0, 0
    %s18 = smul.u32 2, %s17
  $region5: #{bce_masked_loss.1} parent=0 // pred_fallthru
    _
  // Predicated region
  $region6: #{bce_masked_loss.1} parent=0 // pred_check
    _
  $region7: #{bce_masked_loss.1} parent=0 // pred_check_branch
    %20 = sbr.rel (0) target = $region9
  $region8: #{bce_masked_loss.1} parent=0 // pred_region
    %s21 = sadd.s32 0, 0
    %s22 = smul.u32 2, %s21
    %p23 = scmp.lt.s32.totalorder %s22, 1
    %s24 = scalar_select %p23, %s22, 1
    %s25 = smul.addr %s24, 8
    %s26 = scalar_lea.vmem %s1, %s25
    %s27 = sadd.s32 0, 0
    %s28 = smul.u32 2, %s27
  $region9: #{bce_masked_loss.1} parent=0 // pred_fallthru
    _
  %s29 = sadd.s32 0, 0
  %s30 = smul.u32 2, %s29
  %p31 = scmp.lt.s32.totalorder %s30, 1
  %s32 = scalar_select %p31, %s30, 1
  %s33 = smul.addr %s32, 8
  %s34 = scalar_lea.vmem %s0, %s33
  %s35 = sadd.s32 0, 0
  %s36 = smul.u32 2, %s35
  %p37 = scmp.lt.s32.totalorder %s36, 1
  %s38 = scalar_select %p37, %s36, 1
  %s39 = smul.addr %s38, 8
  %s40 = scalar_lea.vmem %s1, %s39
  %s41 = sadd.s32 0, 0
  %s42 = smul.u32 2, %s41
  %p43 = scmp.lt.s32.totalorder %s42, 1
  %s44 = scalar_select %p43, %s42, 1
  %s45 = smul.addr %s44, 8
  %s46 = scalar_lea.vmem %s0, %s45
  %s47 = sadd.s32 0, 0
  %s48 = smul.u32 2, %s47
  %s49 = sadd.s32 0, 0
  %s50 = smul.u32 2, %s49
  %p51 = scmp.lt.s32.totalorder %s50, 1
  %s52 = scalar_select %p51, %s50, 1
  %s53 = smul.addr %s52, 8
  %s54 = scalar_lea.vmem %s1, %s53
  %s55 = sadd.s32 0, 0
  %s56 = smul.u32 2, %s55
  %p57 = scmp.eq.s32.totalorder 0, 0
  // Predicated region
  $region10: #{bce_masked_loss.1} parent=0 // pred_check
    %p58 = pneg %p57
  $region11: #{bce_masked_loss.1} parent=0 // pred_check_branch
    %60 = sbr.rel (%p58) target = $region13
  $region12: #{bce_masked_loss.1} parent=0 // pred_region
    %61 = vst [vmem:[#allocation2] sm:$0xff] 0.0
    %62 = vst [vmem:[#allocation3] sm:$0xff] 0.0
  $region13: #{bce_masked_loss.1} parent=0 // pred_fallthru
    _
  %v63 = vld [vmem:[%s46] sm:$0xff]
  %v64 = vld [vmem:[%s46 + $0x8] sm:$0xff]
  %v65 = vld [vmem:[%s54] sm:$0xff]
  %v66 = vld [vmem:[%s54 + $0x8] sm:$0xff]
  %v67 = vmul.f32 %v65, %v65
  %v68 = vmul.f32 %v66, %v66
  %v69 = vadd.f32 %v65, %v67
  %v70 = vadd.f32 %v66, %v68
  %v71 = vmul.f32 %v69, 0.5
  %v72 = vmul.f32 %v70, 0.5
  %vm73 = vcmp.gt.f32.partialorder %v67, 0.0
  %vm74 = vcmp.gt.f32.partialorder %v68, 0.0
  %v75 = vand.u32 2147483647, %v63
  %v76 = vand.u32 2147483647, %v64
  %v77 = vsub.f32 0.0, %v75
  %v78 = vsub.f32 0.0, %v76
  %v79 = vmul.f32 %v77, 1.442695
  %v80 = vpow.pop %v79
  %v81 = vmul.f32 %v78, 1.442695
  %v82 = vpow.pop %v81
  %v83 = vadd.f32 %v80, 1.0
  %v84 = vadd.f32 %v82, 1.0
  %v85 = vmax.f32 %v63, 0.0
  %v86 = vmax.f32 %v64, 0.0
  %v87 = vmul.f32 %v63, %v71
  %v88 = vmul.f32 %v64, %v72
  %v89 = vsub.f32 %v85, %v87
  %v90 = vsub.f32 %v86, %v88
  %v91 = vadd.f32 %v80, 1.0
  %v92 = vlog2.pop %v91
  %v93 = vmul.f32 %v92, 0.6931472
  %v94 = vmul.f32 -0.5, %v80
  %v95 = vadd.f32 %v94, 1.0
  %v96 = vmul.f32 %v95, %v80
  %v97 = vand.u32 2147483647, %v80
  %vm98 = vcmp.lt.f32.partialorder %v97, 0.0004427343
  %v99 = vsel %vm98, %v96, %v93
  %v100 = vadd.f32 %v82, 1.0
  %v101 = vlog2.pop %v100
  %v102 = vmul.f32 %v101, 0.6931472
  %v103 = vmul.f32 -0.5, %v82
  %v104 = vadd.f32 %v103, 1.0
  %v105 = vmul.f32 %v104, %v82
  %v106 = vand.u32 2147483647, %v82
  %vm107 = vcmp.lt.f32.partialorder %v106, 0.0004427343
  %v108 = vsel %vm107, %v105, %v102
  %v109 = vadd.f32 %v89, %v99
  %v110 = vadd.f32 %v90, %v108
  %v111 = vrcp.pop %v83
  %v112 = vrcp.pop %v84
  %v113 = vmul.f32 %v83, %v111
  %v114 = vmul.f32 %v84, %v112
  %v115 = vsub.f32 2.0, %v113
  %v116 = vsub.f32 2.0, %v114
  %v117 = vmul.f32 %v111, %v115
  %v118 = vmul.f32 %v112, %v116
  %vm119 = vcmp.ge.f32.partialorder %v63, 0.0
  %vm120 = vcmp.ge.f32.partialorder %v64, 0.0
  %v121 = vmul.f32 %v80, %v117
  %v122 = vmul.f32 %v82, %v118
  %v123 = vsel %vm119, %v117, %v121
  %v124 = vsel %vm120, %v118, %v122
  %v125 = vsub.f32 %v71, %v123
  %v126 = vsub.f32 %v72, %v124
  %v127 = vmul.f32 %v125, %v125
  %v128 = vmul.f32 %v126, %v126
  %v129 = vmul.f32 %v127, %v109
  %v130 = vmul.f32 %v128, %v110
  %v131 = vsel %vm73, %v129, 0.0
  %v132 = vsel %vm74, %v130, 0.0
  %v133 = vsel %vm73, 1.0, 0.0
  %v134 = vsel %vm74, 1.0, 0.0
  %v135 = vld [vmem:[#allocation2] sm:$0xff]
  %v136 = vadd.f32 %v131, %v132
  %v137 = vadd.f32 %v135, %v136
  %138 = vst [vmem:[#allocation2] sm:$0xff] %v137
  %v139 = vld [vmem:[#allocation3] sm:$0xff]
  %v140 = vadd.f32 %v133, %v134
  %v141 = vadd.f32 %v139, %v140
  %142 = vst [vmem:[#allocation3] sm:$0xff] %v141
  // Predicated region
  $region14: #{bce_masked_loss.1} parent=0 // pred_check
    %p143 = pneg %p57
  $region15: #{bce_masked_loss.1} parent=0 // pred_check_branch
    %145 = sbr.rel (%p143) target = $region17
  $region16: #{bce_masked_loss.1} parent=0 // pred_region
    %v146 = vld [vmem:[#allocation2] sm:$0xff]
    %147 = vst [vmem:[%s2] sm:$0xff] %v146
    %v148 = vld [vmem:[#allocation3] sm:$0xff]
    %149 = vst [vmem:[%s3] sm:$0xff] %v148
  $region17: #{bce_masked_loss.1} parent=0 // pred_fallthru
    _
  // Predicated region
  $region18: #{bce_masked_loss.1} parent=0 // pred_check
    _
  $region19: #{bce_masked_loss.1} parent=0 // pred_check_branch
    %151 = sbr.rel (0) target = $region21
  $region20: #{bce_masked_loss.1} parent=0 // pred_region
    _
  $region21: #{bce_masked_loss.1} parent=0 // pred_fallthru
    _
  // Predicated region
  $region22: #{bce_masked_loss.1} parent=0 // pred_check
    _
  $region23: #{bce_masked_loss.1} parent=0 // pred_check_branch
    %153 = sbr.rel (0) target = $region25
  $region24: #{bce_masked_loss.1} parent=0 // pred_region
    _
  $region25: #{bce_masked_loss.1} parent=0 // pred_fallthru
    _
  // Predicated region
  $region26: #{bce_masked_loss.1} parent=0 // pred_check
    _
  $region27: #{bce_masked_loss.1} parent=0 // pred_check_branch
    %155 = sbr.rel (0) target = $region29
  $region28: #{bce_masked_loss.1} parent=0 // pred_region
    _
  $region29: #{bce_masked_loss.1} parent=0 // pred_fallthru
    _
  // Predicated region
  $region30: #{bce_masked_loss.1} parent=0 // pred_check
    _
  $region31: #{bce_masked_loss.1} parent=0 // pred_check_branch
    %157 = sbr.rel (0) target = $region33
  $region32: #{bce_masked_loss.1} parent=0 // pred_region
    _
  $region33: #{bce_masked_loss.1} parent=0 // pred_fallthru
    _

</llo_original>
